<compile_context>
chip_gen: v7x
topology: tpu7x:2x2x1
jax: 0.10.0
libtpu: 0.0.40
codegen_flags: <defaults>
</compile_context>

<pallas_src>
import jax
import jax.numpy as jnp
from jax.experimental import pallas as pl
from jax.experimental.pallas import tpu as pltpu


# ---------------------------------------------------------------------------
# Kernels
# ---------------------------------------------------------------------------

def _linear_small_kernel(x_ref, w_ref, b_ref, o_ref):
    # One MXU matmul with f32 accumulation; bias folded into the single store.
    acc = jnp.dot(x_ref[...], w_ref[...], preferred_element_type=jnp.float32)
    o_ref[...] = (acc + b_ref[...]).astype(o_ref.dtype)


def _linear_tiled_kernel(x_ref, w_ref, b_ref, o_ref, acc_ref):
    # Grid = (M/tm, N/tn, K/tk); K is the trailing (reduction) axis.
    k = pl.program_id(2)

    @pl.when(k == 0)
    def _():
        acc_ref[...] = jnp.zeros_like(acc_ref)

    acc_ref[...] += jnp.dot(x_ref[...], w_ref[...],
                            preferred_element_type=jnp.float32)

    @pl.when(k == pl.num_programs(2) - 1)
    def _():
        o_ref[...] = (acc_ref[...] + b_ref[...]).astype(o_ref.dtype)


# ---------------------------------------------------------------------------
# Wrappers
# ---------------------------------------------------------------------------

def _cost(m, k, n, itemsize):
    return pl.CostEstimate(
        flops=2 * m * k * n,
        transcendentals=0,
        bytes_accessed=itemsize * (m * k + k * n + n + m * n),
    )


def _linear_small(x, w_t, b_row):
    """Gridless whole-array call: used when shapes are tiny / not 128-aligned."""
    m, k = x.shape
    _, n = w_t.shape
    vmem = pltpu.MemorySpace.VMEM
    return pl.pallas_call(
        _linear_small_kernel,
        out_shape=jax.ShapeDtypeStruct((m, n), x.dtype),
        in_specs=[
            pl.BlockSpec(memory_space=vmem),
            pl.BlockSpec(memory_space=vmem),
            pl.BlockSpec(memory_space=vmem),
        ],
        out_specs=pl.BlockSpec(memory_space=vmem),
        cost_estimate=_cost(m, k, n, jnp.dtype(x.dtype).itemsize),
    )(x, w_t, b_row)


def _linear_tiled(x, w_t, b_row, tm, tn, tk):
    """Production-size tiled path (P1 + P3): K-reduction grid axis, f32 accumulator."""
    m, k = x.shape
    _, n = w_t.shape
    grid = (m // tm, n // tn, k // tk)
    return pl.pallas_call(
        _linear_tiled_kernel,
        out_shape=jax.ShapeDtypeStruct((m, n), x.dtype),
        grid_spec=pltpu.PrefetchScalarGridSpec(
            num_scalar_prefetch=0,
            grid=grid,
            in_specs=[
                pl.BlockSpec((tm, tk), lambda i, j, kk: (i, kk)),   # x tile
                pl.BlockSpec((tk, tn), lambda i, j, kk: (kk, j)),   # W^T tile
                pl.BlockSpec((1, tn), lambda i, j, kk: (0, j)),     # bias row tile
            ],
            out_specs=pl.BlockSpec((tm, tn), lambda i, j, kk: (i, j)),
            scratch_shapes=[pltpu.VMEM((tm, tn), jnp.float32)],
        ),
        compiler_params=pltpu.CompilerParams(
            # M/N parallel -> v7x's 2 TensorCores split output tiles; neutral on v5e/v6e.
            dimension_semantics=("parallel", "parallel", "arbitrary"),
            # Explicit budget; <= v7x scoped VMEM, plenty for <=512-wide f32 tiles
            # double-buffered.
            vmem_limit_bytes=32 * 1024 * 1024,
        ),
        cost_estimate=_cost(m, k, n, jnp.dtype(x.dtype).itemsize),
    )(x, w_t, b_row)


def _pick_tile(dim, candidates=(512, 256, 128)):
    for t in candidates:
        if dim % t == 0:
            return t
    return None


def prepare_params(w, b):
    """One-time parameter prep (outside the hot path).

    w: (hidden, input) as stored by torch.nn.Linear; b: (hidden,).
    Returns W^T with shape (input, hidden) and bias as a (1, hidden) row.
    """
    w_t = jnp.asarray(w).T
    b_row = jnp.asarray(b).reshape(1, -1)
    return w_t, b_row


@jax.jit
def linear_forward(x, w_t, b_row):
    """Forward of TorchModel: (B, In) @ (In, H) + (1, H) -> (B, H)."""
    m, k = x.shape
    _, n = w_t.shape
    tm, tn, tk = _pick_tile(m), _pick_tile(n), _pick_tile(k)
    if tm is not None and tn is not None and tk is not None:
        return _linear_tiled(x, w_t, b_row, tm, tn, tk)
    # Tiny / unaligned shapes: single whole-array call (fits in a few vregs).
    return _linear_small(x, w_t, b_row)


if __name__ == "__main__":
    # Small shapes consistent with the module: batch=8, input_size=32, hidden_size1=16.
    batch, input_size, hidden_size1 = 8, 32, 16

    key = jax.random.PRNGKey(0)
    kx, kw, kb = jax.random.split(key, 3)

    # Deterministic parameter init (Kaiming-uniform-ish bound like torch.nn.Linear).
    bound = 1.0 / (input_size ** 0.5)
    # PyTorch stores nn.Linear weight as (hidden, input).
    w = jax.random.uniform(kw, (hidden_size1, input_size), jnp.float32, -bound, bound)
    b = jax.random.uniform(kb, (hidden_size1,), jnp.float32, -bound, bound)
    x = jax.random.normal(kx, (batch, input_size), jnp.float32)

    w_t, b_row = prepare_params(w, b)
    y = linear_forward(x, w_t, b_row)
    jax.block_until_ready(y)

    y_ref = jnp.dot(x, w.T, precision=jax.lax.Precision.HIGHEST) + b
    assert y.shape == (batch, hidden_size1)
    assert jnp.allclose(y, y_ref, atol=1e-4, rtol=1e-4)

    # Exercise the tiled production path once at a modest 128-aligned size.
    Bm, Km, Hm = 256, 512, 384
    kx2, kw2, kb2 = jax.random.split(jax.random.PRNGKey(1), 3)
    bound2 = 1.0 / (Km ** 0.5)
    w2 = jax.random.uniform(kw2, (Hm, Km), jnp.float32, -bound2, bound2)
    b2 = jax.random.uniform(kb2, (Hm,), jnp.float32, -bound2, bound2)
    x2 = jax.random.normal(kx2, (Bm, Km), jnp.float32)
    w2_t, b2_row = prepare_params(w2, b2)
    y2 = linear_forward(x2, w2_t, b2_row)
    jax.block_until_ready(y2)
    y2_ref = jnp.dot(x2, w2.T, precision=jax.lax.Precision.HIGHEST) + b2
    assert y2.shape == (Bm, Hm)
    assert jnp.allclose(y2, y2_ref, atol=1e-3, rtol=1e-3)

    print("KERNEL_OK")
</pallas_src>

<mosaic_0001>
module attributes {stable_mosaic.version = 11 : i64} {
  func.func @_linear_small_kernel(%arg0: memref<8x32xf32, #tpu.memory_space<vmem>>, %arg1: memref<32x16xf32, #tpu.memory_space<vmem>>, %arg2: memref<1x16xf32, #tpu.memory_space<vmem>>, %arg3: memref<8x16xf32, #tpu.memory_space<vmem>>) attributes {dimension_semantics = [], scalar_prefetch = 0 : i64, scratch_operands = 0 : i64, tpu.core_type = #tpu.core_type<tc>} {
    %c0 = arith.constant 0 : index
    %c0_0 = arith.constant 0 : index
    %0 = vector.load %arg0[%c0, %c0_0] : memref<8x32xf32, #tpu.memory_space<vmem>>, vector<8x32xf32>
    %c0_1 = arith.constant 0 : index
    %c0_2 = arith.constant 0 : index
    %1 = vector.load %arg1[%c0_1, %c0_2] : memref<32x16xf32, #tpu.memory_space<vmem>>, vector<32x16xf32>
    %cst = arith.constant dense<0.000000e+00> : vector<8x16xf32>
    %2 = tpu.matmul %0, %1, %cst {dimension_numbers = #tpu.dot_dimension_numbers<[1], [0], [0], [1], [0, 0, 1, 1], [], []>} : vector<8x32xf32>, vector<32x16xf32>, vector<8x16xf32> -> vector<8x16xf32>
    %c0_3 = arith.constant 0 : index
    %c0_4 = arith.constant 0 : index
    %3 = vector.load %arg2[%c0_3, %c0_4] : memref<1x16xf32, #tpu.memory_space<vmem>>, vector<1x16xf32>
    %4 = vector.broadcast %3 : vector<1x16xf32> to vector<8x16xf32>
    %5 = arith.addf %2, %4 : vector<8x16xf32>
    %c0_5 = arith.constant 0 : index
    %c0_6 = arith.constant 0 : index
    %6 = vector.load %arg3[%c0_5, %c0_6] : memref<8x16xf32, #tpu.memory_space<vmem>>, vector<8x16xf32>
    tpu.vector_store %arg3[%c0_5, %c0_6], %5 {strides = array<i32>} : memref<8x16xf32, #tpu.memory_space<vmem>>, vector<8x16xf32>,
    return
  }
}

</mosaic_0001>

<llo_original>
// kernel: linear_forward.1
$region0: #{linear_forward.1}
  #allocation0 [shape = 'u32[]', space=smem, size = 0x4, offset = 0x4, fixed_abs, tag = 'smem constant byte address 0x4 - core index']
  #allocation1 [shape = 'u32[144,128]{1,0:T(1,128)}', space=vmem, size = 0x12000, scoped, tag = 'internal scratch']
  %s0 = inlined_call_operand.vmem [shape: f32[8,32], index: 0, kind: input, shape index: {}]
  %s1 = inlined_call_operand.vmem [shape: f32[32,16], index: 1, kind: input, shape index: {}]
  %s2 = inlined_call_operand.vmem [shape: f32[1,16], index: 2, kind: input, shape index: {}]
  %s3 = inlined_call_operand.hbm [shape: f32[8,16], index: 3, kind: output, shape index: {}]
  %s4 = sld [smem:[#allocation0]]
  $region22: #{linear_forward.1} parent=0
    _
  %s6 = ssub.s32 1, %s4
  %s7 = scalar_select 0, %s6, %s4
  $region1: #{linear_forward.1} parent=0
    #allocation2 [shape = 'u8[4096]{0}', space=vmem, size = 0x1000, scoped, tag = 'output window, operand 0, single buffered']
    #allocation3 [shape = 's32[1]{0}', space=sflag, size = 0x4, scoped, tag = 'scoped memory for linear_forward.1']
    %8 = vsyncpa [#allocation3], 0
    // Predicated region
    $region2: #{linear_forward.1} parent=1 // pred_check
      _
    $region3: #{linear_forward.1} parent=1 // pred_check_branch
      %10 = sbr.rel (0) target = $region5
    $region4: #{linear_forward.1} parent=1 // pred_region
      _
    $region5: #{linear_forward.1} parent=1 // pred_fallthru
      _
    // Predicated region
    $region6: #{linear_forward.1} parent=1 // pred_check
      _
    $region7: #{linear_forward.1} parent=1 // pred_check_branch
      %12 = sbr.rel (0) target = $region9
    $region8: #{linear_forward.1} parent=1 // pred_region
      _
    $region9: #{linear_forward.1} parent=1 // pred_fallthru
      _
    // Predicated region
    $region10: #{linear_forward.1} parent=1 // pred_check
      _
    $region11: #{linear_forward.1} parent=1 // pred_check_branch
      %14 = sbr.rel (0) target = $region13
    $region12: #{linear_forward.1} parent=1 // pred_region
      _
    $region13: #{linear_forward.1} parent=1 // pred_fallthru
      _
    %v15 = vld [vmem:[%s0] sm:$0xff]
    %v16 = vld [vmem:[%s1] sm:$0xff]
    %v17 = vld [vmem:[%s1 + $0x8] sm:$0xff]
    %v18 = vld [vmem:[%s1 + $0x10] sm:$0xff]
    %v19 = vld [vmem:[%s1 + $0x18] sm:$0xff]
    %v20 = vld [vmem:[%s2] sm:$0x1]
    %v22 = vlaneseq
    %v23 = vshrl.u32 %v22, 7
    %v24 = vsub.s32 0, %v23
    %v25 = vrot.slane %v20, %v24
    %vm27 = vcmask 261120
    %v29 = vsel %vm27, %v15, 0
    %31 = vmatprep.subr.mxu0 0.0
    %32 = vmatpush1.msra.mxu0 %v16
    %33 = vmatprep.subr.mxu0 0.0
    %34 = vmatpush1.msra.mxu0 %v17
    %35 = vmatprep.subr.mxu0 0.0
    %36 = vmatpush1.msra.mxu0 %v18
    %37 = vmatprep.subr.mxu0 0.0
    %38 = vmatpush1.msra.mxu0 %v19
    %39 = vmatprep.subr.mxu0 0.0
    %40 = vmatpush1.msra.mxu0 0.0
    %41 = vmatprep.subr.mxu0 0.0
    %42 = vmatpush1.msra.mxu0 0.0
    %43 = vmatprep.subr.mxu0 0.0
    %44 = vmatpush1.msra.mxu0 0.0
    %45 = vmatprep.subr.mxu0 0.0
    %46 = vmatpush1.msra.mxu0 0.0
    %47 = vmatprep.subr.mxu0 0.0
    %48 = vmatpush1.msra.mxu0 0.0
    %49 = vmatprep.subr.mxu0 0.0
    %50 = vmatpush1.msra.mxu0 0.0
    %51 = vmatprep.subr.mxu0 0.0
    %52 = vmatpush1.msra.mxu0 0.0
    %53 = vmatprep.subr.mxu0 0.0
    %54 = vmatpush1.msra.mxu0 0.0
    %55 = vmatprep.subr.mxu0 0.0
    %56 = vmatpush1.msra.mxu0 0.0
    %57 = vmatprep.subr.mxu0 0.0
    %58 = vmatpush1.msra.mxu0 0.0
    %59 = vmatprep.subr.mxu0 0.0
    %60 = vmatpush1.msra.mxu0 0.0
    %61 = vmatprep.subr.mxu0 0.0
    %62 = vmatpush1.msra.mxu0 0.0
    %63 = vmatprep.subr.mxu0 0.0
    %64 = vmatpush1.msra.mxu0 0.0
    %65 = vmatprep.subr.mxu0 0.0
    %66 = vmatpush1.msra.mxu0 0.0
    %67 = vmatprep.subr.mxu0 0.0
    %68 = vmatpush1.msra.mxu0 0.0
    %69 = vmatprep.subr.mxu0 0.0
    %70 = vmatpush1.msra.mxu0 0.0
    %71 = vmatprep.subr.mxu0 0.0
    %72 = vmatpush1.msra.mxu0 0.0
    %73 = vmatprep.subr.mxu0 0.0
    %74 = vmatpush1.msra.mxu0 0.0
    %75 = vmatprep.subr.mxu0 0.0
    %76 = vmatpush1.msra.mxu0 0.0
    %77 = vmatprep.subr.mxu0 0.0
    %78 = vmatpush1.msra.mxu0 0.0
    %79 = vmatprep.subr.mxu0 0.0
    %80 = vmatpush1.msra.mxu0 0.0
    %81 = vmatprep.subr.mxu0 0.0
    %82 = vmatpush1.msra.mxu0 0.0
    %83 = vmatprep.subr.mxu0 0.0
    %84 = vmatpush1.msra.mxu0 0.0
    %85 = vmatprep.subr.mxu0 0.0
    %86 = vmatpush1.msra.mxu0 0.0
    %87 = vmatprep.subr.mxu0 0.0
    %88 = vmatpush1.msra.mxu0 0.0
    %89 = vmatprep.subr.mxu0 0.0
    %90 = vmatpush1.msra.mxu0 0.0
    %91 = vmatprep.subr.mxu0 0.0
    %92 = vmatpush1.msra.mxu0 0.0
    %93 = vmatprep.subr.mxu0 0.0
    %94 = vmatpush1.msra.mxu0 0.0
    %95 = vmatprep.mubr.f32.mxu0 0.0
    %96 = vmatmul.mubr.f32.gmra.mrb[0].mxu0 %v29
    %v97 = vpop.f32.mrb[0].mxu0
    %v98 = vadd.f32 %v25, %v97
    %v99 = vpop.f32.mrb[0].mxu0
    %100 = vdwg.mxu0
    %vm101 = vcmask 130048
    %102 = vst.msk [vmem:[#allocation2] sm:$0xff] %vm101, %v98
    // Predicated region
    $region14: #{linear_forward.1} parent=1 // pred_check
      _
    $region15: #{linear_forward.1} parent=1 // pred_check_branch
      %104 = sbr.rel (0) target = $region17
    $region16: #{linear_forward.1} parent=1 // pred_region
      %s106 = ssub.s32 128, 128
      %107 = vsyncadd [#allocation3], %s106
      %s109 = sshll.u32 [#allocation2], 4
      %s110 = int_to_ptr.vmem [resolvable:$true] %s109
      %112 = dma.vmem_to_hbm [thread:$0]  %s110, 128, %s3, [#allocation3]
    $region17: #{linear_forward.1} parent=1 // pred_fallthru
      _
    // Predicated region
    $region18: #{linear_forward.1} parent=1 // pred_check
      _
    $region19: #{linear_forward.1} parent=1 // pred_check_branch
      %114 = sbr.rel (0) target = $region21
    $region20: #{linear_forward.1} parent=1 // pred_region
      %115 = dma.done [#allocation3], 128
    $region21: #{linear_forward.1} parent=1 // pred_fallthru
      _
    %116 = vsyncpa [#allocation3], 1

</llo_original>
